<compile_context>
chip_gen: v5e
topology: v5e:2x2
jax: 0.10.0
libtpu: 0.0.40
codegen_flags: <defaults>
</compile_context>

<pallas_src>
import functools

import jax
import jax.numpy as jnp
from jax.experimental import pallas as pl
from jax.experimental.pallas import tpu as pltpu

EPS = 1e-6  # matches torch.nn.functional.pairwise_distance default eps


def _contrastive_kernel(o1_ref, o2_ref, label_ref, dist_ref, loss_ref, *, margin):
    o1 = o1_ref[...].astype(jnp.float32)          # (TB, D)
    o2 = o2_ref[...].astype(jnp.float32)          # (TB, D)
    lbl = label_ref[...]                          # (1, TB) f32, lane-dense

    # pairwise_distance: ||x1 - x2 + eps||_2 over the feature dim.
    diff = o1 - o2 + EPS
    d2 = jnp.sum(diff * diff, axis=-1).reshape(1, -1)   # (1, TB) lane-dense
    d = jnp.sqrt(d2)
    dist_ref[...] = d

    hinge = jnp.maximum(margin - d, 0.0)
    # Reuse d2 for the similar-pair term instead of recomputing d*d.
    loss_ref[...] = (1.0 - lbl) * d2 + lbl * (hinge * hinge)


def _round_up(x, m):
    return ((x + m - 1) // m) * m


def _choose_tiling(B, D):
    """Rows per batch tile (TB) and grid size (G).

    TB is a multiple of 128 whenever the grid has more than one tile, so the
    lane-dense (1, TB) label/output blocks satisfy the (8, 128) block constraint
    (the (TB, D) input blocks then satisfy the sublane rule for any dtype too).
    """
    if B <= 128:
        return B, 1                       # single full-extent block; too small to split
    # ~4 MiB of f32 working set per input block; cap rows so aux arrays stay tiny.
    tb = (4 << 20) // max(D * 4, 1)
    tb = max(128, min(tb, 16384))
    tb = (tb // 128) * 128
    if tb >= B:
        # Always split into >= 2 tiles so both v7x TensorCores get work.
        tb = _round_up(pl.cdiv(B, 2), 128)
    else:
        g = pl.cdiv(B, tb)
        if g > 1 and g % 2 == 1:
            # Prefer an even tile count so v7x's two cores stay balanced.
            tb_even = _round_up(pl.cdiv(B, g + 1), 128)
            if pl.cdiv(B, tb_even) % 2 == 0:
                tb = tb_even
    return tb, pl.cdiv(B, tb)


def similarity_forward(output1, output2, label, margin=2.0):
    """output1/output2: (B, D); label: (B, 1) or (B,).

    Returns (euclidean_distance (B, 1) float32, scalar contrastive loss float32).
    """
    B, D = output1.shape
    label_row = jnp.reshape(label, (1, B)).astype(jnp.float32)   # lane-dense labels

    itemsize = jnp.dtype(output1.dtype).itemsize
    TB, G = _choose_tiling(B, D)

    # Pipelined working set: 2 inputs x 2 buffers (input dtype) + ~3 f32 temporaries
    # per tile + lane-dense aux (label + 2 outputs, double-buffered) + headroom.
    blk_in = TB * D * itemsize
    blk_f32 = TB * D * 4
    aux = 8 * TB * 4
    vmem_need = 4 * blk_in + 3 * blk_f32 + aux + (2 << 20)
    vmem_limit = int(min(max(vmem_need, 24 << 20), 56 << 20))   # fits v7x's 64 MiB/TC

    kernel = functools.partial(_contrastive_kernel, margin=float(margin))

    dist_row, loss_row = pl.pallas_call(
        kernel,
        out_shape=(
            jax.ShapeDtypeStruct((1, B), jnp.float32),   # euclidean distance per row
            jax.ShapeDtypeStruct((1, B), jnp.float32),   # per-row loss contribution
        ),
        grid=(G,),
        in_specs=[
            pl.BlockSpec((TB, D), lambda i: (i, 0)),
            pl.BlockSpec((TB, D), lambda i: (i, 0)),
            pl.BlockSpec((1, TB), lambda i: (0, i)),
        ],
        out_specs=(
            pl.BlockSpec((1, TB), lambda i: (0, i)),
            pl.BlockSpec((1, TB), lambda i: (0, i)),
        ),
        compiler_params=pltpu.CompilerParams(
            dimension_semantics=("parallel",),
            vmem_limit_bytes=vmem_limit,
        ),
    )(output1, output2, label_row)

    # Tiny wrapper-side reduce (reads 4*B bytes), kept outside the kernel so the grid
    # axis stays fully parallel and the ragged last tile needs no in-kernel masking.
    loss = jnp.mean(loss_row)
    return dist_row.reshape(B, 1), loss


def _reference(output1, output2, label, margin=2.0):
    label = jnp.reshape(label, (-1, 1)).astype(jnp.float32)
    diff = output1.astype(jnp.float32) - output2.astype(jnp.float32) + EPS
    d = jnp.sqrt(jnp.sum(diff * diff, axis=-1, keepdims=True))
    loss = jnp.mean((1.0 - label) * d**2 + label * jnp.maximum(margin - d, 0.0) ** 2)
    return d, loss


if __name__ == "__main__":
    key = jax.random.PRNGKey(0)
    ks = jax.random.split(key, 9)

    # Small siamese-head-sized example (single full-block tile).
    B, D = 8, 32
    o1 = jax.random.normal(ks[0], (B, D), dtype=jnp.float32)
    o2 = jax.random.normal(ks[1], (B, D), dtype=jnp.float32)
    lbl = jax.random.bernoulli(ks[2], 0.5, (B, 1)).astype(jnp.float32)

    dist, loss = similarity_forward(o1, o2, lbl)
    jax.block_until_ready(loss)
    print(dist)   # mirrors the `print(euclidean_distance)` side effect in torch forward

    dref, lref = _reference(o1, o2, lbl)
    assert jnp.allclose(dist, dref, rtol=1e-5, atol=1e-5)
    assert jnp.allclose(loss, lref, rtol=1e-5, atol=1e-5)

    # Multi-tile path: even 2-way split (G=2), ragged last tile on the lane axis.
    B2, D2 = 2500, 128
    o1b = jax.random.normal(ks[3], (B2, D2), dtype=jnp.float32)
    o2b = jax.random.normal(ks[4], (B2, D2), dtype=jnp.float32)
    lblb = jax.random.bernoulli(ks[5], 0.5, (B2, 1)).astype(jnp.float32)
    dist2, loss2 = similarity_forward(o1b, o2b, lblb)
    jax.block_until_ready(loss2)
    dist2_ref, loss2_ref = _reference(o1b, o2b, lblb)
    assert jnp.allclose(dist2, dist2_ref, rtol=1e-5, atol=1e-5)
    assert jnp.allclose(loss2, loss2_ref, rtol=1e-5, atol=1e-5)

    # Capacity-limited multi-tile path: odd grid bumped to an even count (G=4).
    B3, D3 = 5000, 512
    o1c = jax.random.normal(ks[6], (B3, D3), dtype=jnp.float32)
    o2c = jax.random.normal(ks[7], (B3, D3), dtype=jnp.float32)
    lblc = jax.random.bernoulli(ks[8], 0.5, (B3, 1)).astype(jnp.float32)
    dist3, loss3 = similarity_forward(o1c, o2c, lblc)
    jax.block_until_ready(loss3)
    dist3_ref, loss3_ref = _reference(o1c, o2c, lblc)
    assert jnp.allclose(dist3, dist3_ref, rtol=1e-5, atol=1e-5)
    assert jnp.allclose(loss3, loss3_ref, rtol=1e-5, atol=1e-5)

    print("KERNEL_OK")
</pallas_src>

<mosaic_0001>
module attributes {stable_mosaic.version = 11 : i64} {
  func.func @_contrastive_kernel(%arg0: i32, %arg1: memref<8x32xf32, #tpu.memory_space<vmem>>, %arg2: memref<8x32xf32, #tpu.memory_space<vmem>>, %arg3: memref<1x8xf32, #tpu.memory_space<vmem>>, %arg4: memref<1x8xf32, #tpu.memory_space<vmem>>, %arg5: memref<1x8xf32, #tpu.memory_space<vmem>>) attributes {dimension_semantics = [#tpu.dimension_semantics<parallel>], iteration_bounds = array<i64: 1>, scalar_prefetch = 0 : i64, scratch_operands = 0 : i64, tpu.core_type = #tpu.core_type<tc>, window_params = [{transform_indices = @transform_0, window_bounds = array<i64: 8, 32>}, {transform_indices = @transform_1, window_bounds = array<i64: 8, 32>}, {transform_indices = @transform_2, window_bounds = array<i64: 1, 8>}, {transform_indices = @transform_3, window_bounds = array<i64: 1, 8>}, {transform_indices = @transform_4, window_bounds = array<i64: 1, 8>}]} {
    %c0 = arith.constant 0 : index
    %c0_0 = arith.constant 0 : index
    %0 = vector.load %arg1[%c0, %c0_0] : memref<8x32xf32, #tpu.memory_space<vmem>>, vector<8x32xf32>
    %c0_1 = arith.constant 0 : index
    %c0_2 = arith.constant 0 : index
    %1 = vector.load %arg2[%c0_1, %c0_2] : memref<8x32xf32, #tpu.memory_space<vmem>>, vector<8x32xf32>
    %c0_3 = arith.constant 0 : index
    %c0_4 = arith.constant 0 : index
    %2 = vector.load %arg3[%c0_3, %c0_4] : memref<1x8xf32, #tpu.memory_space<vmem>>, vector<1x8xf32>
    %3 = arith.subf %0, %1 : vector<8x32xf32>
    %cst = arith.constant 9.99999997E-7 : f32
    %4 = vector.broadcast %cst : f32 to vector<8x32xf32>
    %5 = arith.addf %3, %4 : vector<8x32xf32>
    %6 = arith.mulf %5, %5 : vector<8x32xf32>
    %cst_5 = arith.constant dense<0.000000e+00> : vector<8xf32>
    %7 = vector.multi_reduction <add>, %6, %cst_5 [1] : vector<8x32xf32> to vector<8xf32>
    %8 = vector.shape_cast %7 : vector<8xf32> to vector<1x8xf32>
    %9 = math.sqrt %8 : vector<1x8xf32>
    %c0_6 = arith.constant 0 : index
    %c0_7 = arith.constant 0 : index
    %10 = vector.load %arg4[%c0_6, %c0_7] : memref<1x8xf32, #tpu.memory_space<vmem>>, vector<1x8xf32>
    tpu.vector_store %arg4[%c0_6, %c0_7], %9 {strides = array<i32>} : memref<1x8xf32, #tpu.memory_space<vmem>>, vector<1x8xf32>,
    %cst_8 = arith.constant 2.000000e+00 : f32
    %11 = vector.broadcast %cst_8 : f32 to vector<1x8xf32>
    %12 = arith.subf %11, %9 : vector<1x8xf32>
    %cst_9 = arith.constant 0.000000e+00 : f32
    %13 = vector.broadcast %cst_9 : f32 to vector<1x8xf32>
    %14 = arith.maximumf %12, %13 : vector<1x8xf32>
    %cst_10 = arith.constant 1.000000e+00 : f32
    %15 = vector.broadcast %cst_10 : f32 to vector<1x8xf32>
    %16 = arith.subf %15, %2 : vector<1x8xf32>
    %17 = arith.mulf %16, %8 : vector<1x8xf32>
    %18 = arith.mulf %14, %14 : vector<1x8xf32>
    %19 = arith.mulf %2, %18 : vector<1x8xf32>
    %20 = arith.addf %17, %19 : vector<1x8xf32>
    %c0_11 = arith.constant 0 : index
    %c0_12 = arith.constant 0 : index
    %21 = vector.load %arg5[%c0_11, %c0_12] : memref<1x8xf32, #tpu.memory_space<vmem>>, vector<1x8xf32>
    tpu.vector_store %arg5[%c0_11, %c0_12], %20 {strides = array<i32>} : memref<1x8xf32, #tpu.memory_space<vmem>>, vector<1x8xf32>,
    return
  }
  func.func @transform_0(%arg0: i32) -> (i32, i32) {
    %c0_i32 = arith.constant 0 : i32
    %c0_i32_0 = arith.constant 0 : i32
    return %arg0, %c0_i32 : i32, i32
  }
  func.func @transform_1(%arg0: i32) -> (i32, i32) {
    %c0_i32 = arith.constant 0 : i32
    %c0_i32_0 = arith.constant 0 : i32
    return %arg0, %c0_i32 : i32, i32
  }
  func.func @transform_2(%arg0: i32) -> (i32, i32) {
    %c0_i32 = arith.constant 0 : i32
    %c0_i32_0 = arith.constant 0 : i32
    return %c0_i32, %arg0 : i32, i32
  }
  func.func @transform_3(%arg0: i32) -> (i32, i32) {
    %c0_i32 = arith.constant 0 : i32
    %c0_i32_0 = arith.constant 0 : i32
    return %c0_i32, %arg0 : i32, i32
  }
  func.func @transform_4(%arg0: i32) -> (i32, i32) {
    %c0_i32 = arith.constant 0 : i32
    %c0_i32_0 = arith.constant 0 : i32
    return %c0_i32, %arg0 : i32, i32
  }
}

</mosaic_0001>

<llo_original>
// kernel: tpu_custom_call.1
$region0: #{tpu_custom_call.1}
  #allocation0 [shape = 'u32[]', space=smem, size = 0x4, offset = 0x4, fixed_abs, tag = 'smem constant byte address 0x4 - core index']
  #allocation1 [shape = 'u32[72,128]{1,0:T(1,128)}', space=vmem, size = 0x9000, scoped, tag = 'internal scratch']
  %s0 = inlined_call_operand.hbm [shape: f32[8,32], index: 0, kind: input, shape index: {}]
  %s1 = inlined_call_operand.hbm [shape: f32[8,32], index: 1, kind: input, shape index: {}]
  %s2 = inlined_call_operand.vmem [shape: f32[1,8], index: 2, kind: input, shape index: {}]
  %s3 = inlined_call_operand.hbm [shape: f32[1,8], index: 3, kind: output, shape index: {0}]
  %s4 = inlined_call_operand.hbm [shape: f32[1,8], index: 4, kind: output, shape index: {1}]
  %5 = xla_tuple %s3, %s4
  %s6 = sld [smem:[#allocation0]]
  $region38: #{tpu_custom_call.1} parent=0
    _
  %s8 = ssub.s32 1, %s6
  %s9 = scalar_select 0, %s8, %s6
  $region1: #{tpu_custom_call.1} parent=0
    #allocation2 [shape = 'u8[4096]{0}', space=vmem, size = 0x1000, scoped, tag = 'input window, operand 0, single buffered']
    #allocation3 [shape = 's32[1]{0}', space=sflag, size = 0x4, scoped, tag = 'scoped memory for tpu_custom_call.1']
    #allocation4 [shape = 's32[1]{0}', space=sflag, size = 0x4, scoped, tag = 'scoped memory for tpu_custom_call.1']
    #allocation5 [shape = 'u8[4096]{0}', space=vmem, size = 0x1000, scoped, tag = 'input window, operand 1, single buffered']
    #allocation6 [shape = 's32[1]{0}', space=sflag, size = 0x4, scoped, tag = 'scoped memory for tpu_custom_call.1']
    #allocation7 [shape = 'u8[512]{0}', space=vmem, size = 0x400, scoped, tag = 'output window, operand 0, single buffered']
    #allocation8 [shape = 'u8[512]{0}', space=vmem, size = 0x400, scoped, tag = 'output window, operand 1, single buffered']
    #allocation9 [shape = 's32[1]{0}', space=sflag, size = 0x4, scoped, tag = 'scoped memory for tpu_custom_call.1']
    %10 = vsyncpa [#allocation3], 0
    %11 = vsyncpa [#allocation6], 0
    %12 = vsyncpa [#allocation4], 0
    %13 = vsyncpa [#allocation9], 0
    // Predicated region
    $region2: #{tpu_custom_call.1} parent=1 // pred_check
      _
    $region3: #{tpu_custom_call.1} parent=1 // pred_check_branch
      %15 = sbr.rel (0) target = $region5
    $region4: #{tpu_custom_call.1} parent=1 // pred_region
      %17 = vsyncadd [#allocation3], 0
      %s19 = sshll.u32 %s0, 4
      %s20 = int_to_ptr.hbm [resolvable:$true] %s19
      %s21 = sshll.u32 [#allocation2], 4
      %s22 = int_to_ptr.vmem [resolvable:$true] %s21
      %24 = dma.hbm_to_vmem [thread:$0]  %s20, 128, %s22, [#allocation3]
    $region5: #{tpu_custom_call.1} parent=1 // pred_fallthru
      _
    // Predicated region
    $region6: #{tpu_custom_call.1} parent=1 // pred_check
      _
    $region7: #{tpu_custom_call.1} parent=1 // pred_check_branch
      %26 = sbr.rel (0) target = $region9
    $region8: #{tpu_custom_call.1} parent=1 // pred_region
      %28 = vsyncadd [#allocation6], 0
      %s30 = sshll.u32 %s1, 4
      %s31 = int_to_ptr.hbm [resolvable:$true] %s30
      %s32 = sshll.u32 [#allocation5], 4
      %s33 = int_to_ptr.vmem [resolvable:$true] %s32
      %35 = dma.hbm_to_vmem [thread:$0]  %s31, 128, %s33, [#allocation6]
    $region9: #{tpu_custom_call.1} parent=1 // pred_fallthru
      _
    // Predicated region
    $region10: #{tpu_custom_call.1} parent=1 // pred_check
      _
    $region11: #{tpu_custom_call.1} parent=1 // pred_check_branch
      %37 = sbr.rel (0) target = $region13
    $region12: #{tpu_custom_call.1} parent=1 // pred_region
      _
    $region13: #{tpu_custom_call.1} parent=1 // pred_fallthru
      _
    // Predicated region
    $region14: #{tpu_custom_call.1} parent=1 // pred_check
      _
    $region15: #{tpu_custom_call.1} parent=1 // pred_check_branch
      %39 = sbr.rel (0) target = $region17
    $region16: #{tpu_custom_call.1} parent=1 // pred_region
      %41 = dma.done [#allocation3], 128
    $region17: #{tpu_custom_call.1} parent=1 // pred_fallthru
      _
    // Predicated region
    $region18: #{tpu_custom_call.1} parent=1 // pred_check
      _
    $region19: #{tpu_custom_call.1} parent=1 // pred_check_branch
      %43 = sbr.rel (0) target = $region21
    $region20: #{tpu_custom_call.1} parent=1 // pred_region
      %45 = dma.done [#allocation6], 128
    $region21: #{tpu_custom_call.1} parent=1 // pred_fallthru
      _
    %v46 = vld [vmem:[#allocation2] sm:$0xff]
    %v47 = vld [vmem:[#allocation5] sm:$0xff]
    %v48 = vld [vmem:[%s2] sm:$0x1]
    %v49 = vsub.f32 %v46, %v47
    %v50 = vadd.f32 %v49, 1e-06
    %v51 = vmul.f32 %v50, %v50
    %vm52 = vcmask 261120
    %v53 = vsel %vm52, %v51, 0.0
    %54 = vadd.xlane.f32.xlu0 %v53
    %v55 = vpop.xlane.xlu0 %54
    %v56 = vrsqrt.pop %v55
    %v57 = vmul.f32 %v56, %v55
    %v58 = vmul.f32 %v57, %v56
    %v59 = vmul.f32 0.5, %v58
    %v60 = vsub.f32 1.5, %v59
    %v61 = vmul.f32 %v56, %v60
    %v62 = vmul.f32 %v55, %v61
    %vm63 = vcmp.eq.f32.partialorder %v55, inf
    %v64 = vsel %vm63, %v55, %v62
    %vm65 = vcmp.eq.f32.partialorder %v55, 0.0
    %v66 = vand.u32 %v55, 2147483648
    %v67 = vsel %vm65, %v66, %v64
    %v69 = vlaneseq
    %v70 = vand.u32 %v69, 127
    %v71 = vperm.slane %v67, %v70
    %vm73 = vcmask 57344
    %74 = vst.msk [vmem:[#allocation7] sm:$0x1] %vm73, %v71
    %v75 = vsub.f32 2.0, %v67
    %v76 = vmax.f32 %v75, 0.0
    %v77 = vsub.f32 1.0, %v48
    %v79 = vperm.slane %v55, 0
    %v80 = vperm.slane %v55, 1
    %v81 = vperm.slane %v55, 2
    %v82 = vperm.slane %v55, 3
    %v83 = vperm.slane %v55, 4
    %v84 = vperm.slane %v55, 5
    %v85 = vperm.slane %v55, 6
    %v86 = vperm.slane %v55, 7
    %87 = vst [vmem:[#allocation1] ss:$9 sm:$0xff] %v79
    %s88 = scalar_lea.vmem [#allocation1], 1
    %89 = vst [vmem:[%s88] ss:$9 sm:$0xff] %v80
    %s90 = scalar_lea.vmem [#allocation1], 2
    %91 = vst [vmem:[%s90] ss:$9 sm:$0xff] %v81
    %s92 = scalar_lea.vmem [#allocation1], 3
    %93 = vst [vmem:[%s92] ss:$9 sm:$0xff] %v82
    %s94 = scalar_lea.vmem [#allocation1], 4
    %95 = vst [vmem:[%s94] ss:$9 sm:$0xff] %v83
    %s96 = scalar_lea.vmem [#allocation1], 5
    %97 = vst [vmem:[%s96] ss:$9 sm:$0xff] %v84
    %s98 = scalar_lea.vmem [#allocation1], 6
    %99 = vst [vmem:[%s98] ss:$9 sm:$0xff] %v85
    %s100 = scalar_lea.vmem [#allocation1], 7
    %101 = vst [vmem:[%s100] ss:$9 sm:$0xff] %v86
    %v102 = vld [vmem:[#allocation1] sm:$0xff]
    %103 = vset.pattern.permute.xlu0 0
    %104 = vperm.xlu0 %103, %v102
    %v105 = vpop.permute.xlu0 %104
    %v106 = vperm.slane %v105, %v70
    %v108 = vmul.f32 %v77, %v106
    %v109 = vmul.f32 %v76, %v76
    %v111 = vperm.slane %v109, 0
    %v112 = vperm.slane %v109, 1
    %v113 = vperm.slane %v109, 2
    %v114 = vperm.slane %v109, 3
    %v115 = vperm.slane %v109, 4
    %v116 = vperm.slane %v109, 5
    %v117 = vperm.slane %v109, 6
    %v118 = vperm.slane %v109, 7
    %119 = vst [vmem:[#allocation1] ss:$9 sm:$0xff] %v111
    %s120 = scalar_lea.vmem [#allocation1], 1
    %121 = vst [vmem:[%s120] ss:$9 sm:$0xff] %v112
    %s122 = scalar_lea.vmem [#allocation1], 2
    %123 = vst [vmem:[%s122] ss:$9 sm:$0xff] %v113
    %s124 = scalar_lea.vmem [#allocation1], 3
    %125 = vst [vmem:[%s124] ss:$9 sm:$0xff] %v114
    %s126 = scalar_lea.vmem [#allocation1], 4
    %127 = vst [vmem:[%s126] ss:$9 sm:$0xff] %v115
    %s128 = scalar_lea.vmem [#allocation1], 5
    %129 = vst [vmem:[%s128] ss:$9 sm:$0xff] %v116
    %s130 = scalar_lea.vmem [#allocation1], 6
    %131 = vst [vmem:[%s130] ss:$9 sm:$0xff] %v117
    %s132 = scalar_lea.vmem [#allocation1], 7
    %133 = vst [vmem:[%s132] ss:$9 sm:$0xff] %v118
    %v134 = vld [vmem:[#allocation1] sm:$0xff]
    %135 = vset.pattern.permute.xlu0 0
    %136 = vperm.xlu0 %135, %v134
    %v137 = vpop.permute.xlu0 %136
    %v138 = vperm.slane %v137, %v70
    %v140 = vmul.f32 %v48, %v138
    %v141 = vadd.f32 %v108, %v140
    %142 = vst.msk [vmem:[#allocation8] sm:$0x1] %vm73, %v141
    // Predicated region
    $region22: #{tpu_custom_call.1} parent=1 // pred_check
      _
    $region23: #{tpu_custom_call.1} parent=1 // pred_check_branch
      %144 = sbr.rel (0) target = $region25
    $region24: #{tpu_custom_call.1} parent=1 // pred_region
      %146 = vsyncadd [#allocation4], 0
      %s148 = sshll.u32 [#allocation7], 4
      %s149 = int_to_ptr.vmem [resolvable:$true] %s148
      %s150 = sshll.u32 %s3, 4
      %s151 = int_to_ptr.hbm [resolvable:$true] %s150
      %153 = dma.vmem_to_hbm [thread:$0]  %s149, 16, %s151, [#allocation4]
    $region25: #{tpu_custom_call.1} parent=1 // pred_fallthru
      _
    // Predicated region
    $region26: #{tpu_custom_call.1} parent=1 // pred_check
      _
    $region27: #{tpu_custom_call.1} parent=1 // pred_check_branch
      %155 = sbr.rel (0) target = $region29
    $region28: #{tpu_custom_call.1} parent=1 // pred_region
      %157 = vsyncadd [#allocation9], 0
      %s159 = sshll.u32 [#allocation8], 4
      %s160 = int_to_ptr.vmem [resolvable:$true] %s159
      %s161 = sshll.u32 %s4, 4
      %s162 = int_to_ptr.hbm [resolvable:$true] %s161
      %164 = dma.vmem_to_hbm [thread:$0]  %s160, 16, %s162, [#allocation9]
    $region29: #{tpu_custom_call.1} parent=1 // pred_fallthru
      _
    // Predicated region
    $region30: #{tpu_custom_call.1} parent=1 // pred_check
      _
    $region31: #{tpu_custom_call.1} parent=1 // pred_check_branch
      %166 = sbr.rel (0) target = $region33
    $region32: #{tpu_custom_call.1} parent=1 // pred_region
      %168 = dma.done [#allocation4], 16
    $region33: #{tpu_custom_call.1} parent=1 // pred_fallthru
      _
    // Predicated region
    $region34: #{tpu_custom_call.1} parent=1 // pred_check
      _
    $region35: #{tpu_custom_call.1} parent=1 // pred_check_branch
      %170 = sbr.rel (0) target = $region37
    $region36: #{tpu_custom_call.1} parent=1 // pred_region
      %172 = dma.done [#allocation9], 16
    $region37: #{tpu_custom_call.1} parent=1 // pred_fallthru
      _
    %173 = vsyncpa [#allocation3], 1
    %174 = vsyncpa [#allocation6], 1
    %175 = vsyncpa [#allocation4], 1
    %176 = vsyncpa [#allocation9], 1

</llo_original>
